<compile_context>
chip_gen: v7x
topology: tpu7x:2x2x1
jax: 0.10.0
libtpu: 0.0.40
codegen_flags: <defaults>
</compile_context>

<pallas_src>
import functools

import jax
import jax.numpy as jnp
from jax.experimental import pallas as pl
from jax.experimental.pallas import tpu as pltpu


def se_attention_kernel(x_ref, w1t_ref, w2t_ref, o_ref, *, inv_hw):
    # x_ref block: (bb, C, HW); w1t: (C, C//r); w2t: (C//r, C); o_ref: (bb, C, HW)
    x = x_ref[...].astype(jnp.float32)                            # (bb, C, HW)

    # Squeeze: global average pool over the spatial (lane) axis -> XLU reduce.
    pooled = jnp.sum(x, axis=-1) * inv_hw                         # (bb, C)

    # Excite: two bias-free linears on the MXU (weights pre-transposed).
    h = jnp.dot(pooled, w1t_ref[...],
                preferred_element_type=jnp.float32)               # (bb, C//r)
    h = jnp.maximum(h, 0.0)                                       # ReLU (VPU)
    s = jnp.dot(h, w2t_ref[...],
                preferred_element_type=jnp.float32)               # (bb, C)
    s = jax.nn.sigmoid(s)                                         # EUP

    # Scale: per-channel gate broadcast across all spatial positions (lanes).
    o_ref[...] = (x * s[:, :, None]).astype(o_ref.dtype)


def _pick_batch_block(b, c, hw, itemsize, budget_bytes=8 * 1024 * 1024):
    """Largest divisor of b whose (double-buffered in+out) tile fits the budget."""
    per_batch = c * hw * itemsize
    max_bb = max(1, budget_bytes // max(1, 4 * per_batch))  # 2 bufs each for in & out
    bb = 1
    for cand in range(1, b + 1):
        if b % cand == 0 and cand <= max_bb:
            bb = cand
    return bb


def se_attention_forward(x, w1, w2):
    """x: (B, C, H, W); w1: (C//r, C); w2: (C, C//r).  Returns (B, C, H, W)."""
    b, c, h, w = x.shape
    hw = h * w
    cr = w1.shape[0]

    x2 = x.reshape(b, c, hw)
    # Wrapper-side weight transpose: pure layout plumbing so the kernel does
    # row-major matmuls with no in-kernel transpose.
    w1t = jnp.transpose(w1)   # (C, C//r)
    w2t = jnp.transpose(w2)   # (C//r, C)

    bb = _pick_batch_block(b, c, hw, x.dtype.itemsize)
    kernel = functools.partial(se_attention_kernel, inv_hw=1.0 / float(hw))

    out = pl.pallas_call(
        kernel,
        out_shape=jax.ShapeDtypeStruct((b, c, hw), x.dtype),
        grid=(b // bb,),
        in_specs=[
            pl.BlockSpec((bb, c, hw), lambda i: (i, 0, 0)),  # per-step x tile
            pl.BlockSpec((c, cr), lambda i: (0, 0)),         # W1.T, VMEM-resident
            pl.BlockSpec((cr, c), lambda i: (0, 0)),         # W2.T, VMEM-resident
        ],
        out_specs=pl.BlockSpec((bb, c, hw), lambda i: (i, 0, 0)),
        compiler_params=pltpu.CompilerParams(
            dimension_semantics=("parallel",),               # shard batch over TCs
        ),
    )(x2, w1t, w2t)
    return out.reshape(b, c, h, w)
    # TODO(synk): for very large H*W (single-batch tile exceeding VMEM), switch
    # to a two-phase grid (spatial-tile pool reduction, then spatial-tile scale).


def reference_forward(x, w1, w2):
    """Pure-JAX reference mirroring the PyTorch SEAttention forward."""
    hp = jax.lax.Precision.HIGHEST
    y = jnp.mean(x, axis=(2, 3))                                  # (B, C)
    y = jax.nn.relu(jnp.dot(y, w1.T, precision=hp))               # (B, C//r)
    y = jax.nn.sigmoid(jnp.dot(y, w2.T, precision=hp))            # (B, C)
    return x * y[:, :, None, None]


if __name__ == "__main__":
    # Small shapes consistent with the module: batch=4, channel=128,
    # reduction=16 (hidden=8), spatial 16x16 (H*W = 256, lane-dense).
    B, C, H, W = 4, 128, 16, 16
    REDUCTION = 16
    CR = C // REDUCTION

    key = jax.random.PRNGKey(0)
    kx, k1, k2 = jax.random.split(key, 3)

    x = jax.random.normal(kx, (B, C, H, W), dtype=jnp.float32)
    # nn.Linear default init: U(-1/sqrt(fan_in), 1/sqrt(fan_in)), bias=False.
    b1 = 1.0 / (C ** 0.5)
    b2 = 1.0 / (CR ** 0.5)
    w1 = jax.random.uniform(k1, (CR, C), jnp.float32, -b1, b1)    # Linear(C -> C//r)
    w2 = jax.random.uniform(k2, (C, CR), jnp.float32, -b2, b2)    # Linear(C//r -> C)

    out = se_attention_forward(x, w1, w2)
    out = jax.block_until_ready(out)

    ref = reference_forward(x, w1, w2)
    assert out.shape == x.shape
    assert jnp.allclose(out, ref, atol=1e-4, rtol=1e-4), "mismatch vs JAX reference"

    print("KERNEL_OK")
</pallas_src>

<mosaic_0001>
module attributes {stable_mosaic.version = 11 : i64} {
  func.func @se_attention_kernel(%arg0: i32, %arg1: memref<4x128x256xf32, #tpu.memory_space<vmem>>, %arg2: memref<128x8xf32, #tpu.memory_space<vmem>>, %arg3: memref<8x128xf32, #tpu.memory_space<vmem>>, %arg4: memref<4x128x256xf32, #tpu.memory_space<vmem>>) attributes {dimension_semantics = [#tpu.dimension_semantics<parallel>], iteration_bounds = array<i64: 1>, scalar_prefetch = 0 : i64, scratch_operands = 0 : i64, tpu.core_type = #tpu.core_type<tc>, window_params = [{transform_indices = @transform_0, window_bounds = array<i64: 4, 128, 256>}, {pipeline_mode = #tpu.pipeline_mode<synchronous>, transform_indices = @transform_1, window_bounds = array<i64: 128, 8>}, {pipeline_mode = #tpu.pipeline_mode<synchronous>, transform_indices = @transform_2, window_bounds = array<i64: 8, 128>}, {transform_indices = @transform_3, window_bounds = array<i64: 4, 128, 256>}]} {
    %c0 = arith.constant 0 : index
    %c0_0 = arith.constant 0 : index
    %c0_1 = arith.constant 0 : index
    %0 = vector.load %arg1[%c0, %c0_0, %c0_1] : memref<4x128x256xf32, #tpu.memory_space<vmem>>, vector<4x128x256xf32>
    %cst = arith.constant dense<0.000000e+00> : vector<4x128xf32>
    %1 = vector.multi_reduction <add>, %0, %cst [2] : vector<4x128x256xf32> to vector<4x128xf32>
    %cst_2 = arith.constant 3.906250e-03 : f32
    %2 = vector.broadcast %cst_2 : f32 to vector<4x128xf32>
    %3 = arith.mulf %1, %2 : vector<4x128xf32>
    %c0_3 = arith.constant 0 : index
    %c0_4 = arith.constant 0 : index
    %4 = vector.load %arg2[%c0_3, %c0_4] : memref<128x8xf32, #tpu.memory_space<vmem>>, vector<128x8xf32>
    %cst_5 = arith.constant dense<0.000000e+00> : vector<4x8xf32>
    %5 = tpu.matmul %3, %4, %cst_5 {dimension_numbers = #tpu.dot_dimension_numbers<[1], [0], [0], [1], [0, 0, 1, 1], [], []>} : vector<4x128xf32>, vector<128x8xf32>, vector<4x8xf32> -> vector<4x8xf32>
    %cst_6 = arith.constant 0.000000e+00 : f32
    %6 = vector.broadcast %cst_6 : f32 to vector<4x8xf32>
    %7 = arith.maximumf %5, %6 : vector<4x8xf32>
    %c0_7 = arith.constant 0 : index
    %c0_8 = arith.constant 0 : index
    %8 = vector.load %arg3[%c0_7, %c0_8] : memref<8x128xf32, #tpu.memory_space<vmem>>, vector<8x128xf32>
    %cst_9 = arith.constant dense<0.000000e+00> : vector<4x128xf32>
    %9 = tpu.matmul %7, %8, %cst_9 {dimension_numbers = #tpu.dot_dimension_numbers<[1], [0], [0], [1], [0, 0, 1, 1], [], []>} : vector<4x8xf32>, vector<8x128xf32>, vector<4x128xf32> -> vector<4x128xf32>
    %10 = arith.negf %9 : vector<4x128xf32>
    %11 = math.exp %10 : vector<4x128xf32>
    %cst_10 = arith.constant 1.000000e+00 : f32
    %12 = vector.broadcast %cst_10 : f32 to vector<4x128xf32>
    %13 = arith.addf %12, %11 : vector<4x128xf32>
    %14 = arith.divf %12, %13 : vector<4x128xf32>
    %15 = vector.shape_cast %14 : vector<4x128xf32> to vector<4x128x1xf32>
    %16 = vector.broadcast %15 : vector<4x128x1xf32> to vector<4x128x256xf32>
    %17 = arith.mulf %0, %16 : vector<4x128x256xf32>
    %c0_11 = arith.constant 0 : index
    %c0_12 = arith.constant 0 : index
    %c0_13 = arith.constant 0 : index
    %18 = vector.load %arg4[%c0_11, %c0_12, %c0_13] : memref<4x128x256xf32, #tpu.memory_space<vmem>>, vector<4x128x256xf32>
    tpu.vector_store %arg4[%c0_11, %c0_12, %c0_13], %17 {strides = array<i32>} : memref<4x128x256xf32, #tpu.memory_space<vmem>>, vector<4x128x256xf32>,
    return
  }
  func.func @transform_0(%arg0: i32) -> (i32, i32, i32) {
    %c0_i32 = arith.constant 0 : i32
    %c0_i32_0 = arith.constant 0 : i32
    %c0_i32_1 = arith.constant 0 : i32
    return %arg0, %c0_i32, %c0_i32_0 : i32, i32, i32
  }
  func.func @transform_1(%arg0: i32) -> (i32, i32) {
    %c0_i32 = arith.constant 0 : i32
    %c0_i32_0 = arith.constant 0 : i32
    %c0_i32_1 = arith.constant 0 : i32
    return %c0_i32, %c0_i32_0 : i32, i32
  }
  func.func @transform_2(%arg0: i32) -> (i32, i32) {
    %c0_i32 = arith.constant 0 : i32
    %c0_i32_0 = arith.constant 0 : i32
    %c0_i32_1 = arith.constant 0 : i32
    return %c0_i32, %c0_i32_0 : i32, i32
  }
  func.func @transform_3(%arg0: i32) -> (i32, i32, i32) {
    %c0_i32 = arith.constant 0 : i32
    %c0_i32_0 = arith.constant 0 : i32
    %c0_i32_1 = arith.constant 0 : i32
    return %arg0, %c0_i32, %c0_i32_0 : i32, i32, i32
  }
}

</mosaic_0001>

<llo_original>
// kernel: tpu_custom_call.1
$region0: #{tpu_custom_call.1}
  #allocation0 [shape = 'u32[]', space=smem, size = 0x4, offset = 0x4, fixed_abs, tag = 'smem constant byte address 0x4 - core index']
  #allocation1 [shape = 'u32[144,128]{1,0:T(1,128)}', space=vmem, size = 0x12000, scoped, tag = 'internal scratch']
  %s0 = inlined_call_operand.hbm [shape: f32[4,128,256], index: 0, kind: input, shape index: {}]
  %s1 = inlined_call_operand.vmem [shape: f32[128,8], index: 1, kind: input, shape index: {}]
  %s2 = inlined_call_operand.vmem [shape: f32[8,128], index: 2, kind: input, shape index: {}]
  %s3 = inlined_call_operand.hbm [shape: f32[4,128,256], index: 3, kind: output, shape index: {}]
  %s4 = sld [smem:[#allocation0]]
  $region26: #{tpu_custom_call.1} parent=0
    _
  %s6 = ssub.s32 1, %s4
  %s7 = scalar_select 0, %s6, %s4
  $region1: #{tpu_custom_call.1} parent=0
    #allocation2 [shape = 'u8[524288]{0}', space=vmem, size = 0x80000, scoped, tag = 'input window, operand 0, single buffered']
    #allocation3 [shape = 's32[1]{0}', space=sflag, size = 0x4, scoped, tag = 'scoped memory for tpu_custom_call.1']
    #allocation4 [shape = 's32[1]{0}', space=sflag, size = 0x4, scoped, tag = 'scoped memory for tpu_custom_call.1']
    #allocation5 [shape = 'u8[524288]{0}', space=vmem, size = 0x80000, scoped, tag = 'output window, operand 0, single buffered']
    %8 = vsyncpa [#allocation3], 0
    %9 = vsyncpa [#allocation4], 0
    // Predicated region
    $region2: #{tpu_custom_call.1} parent=1 // pred_check
      _
    $region3: #{tpu_custom_call.1} parent=1 // pred_check_branch
      %11 = sbr.rel (0) target = $region5
    $region4: #{tpu_custom_call.1} parent=1 // pred_region
      %s13 = ssub.s32 16384, 16384
      %14 = vsyncadd [#allocation3], %s13
      %s15 = sshll.u32 [#allocation2], 4
      %s16 = int_to_ptr.vmem [resolvable:$true] %s15
      %21 = dma.hbm_to_vmem [thread:$0]  %s0, 16384, %s16, [#allocation3], 256, 256, 16
    $region5: #{tpu_custom_call.1} parent=1 // pred_fallthru
      _
    // Predicated region
    $region6: #{tpu_custom_call.1} parent=1 // pred_check
      _
    $region7: #{tpu_custom_call.1} parent=1 // pred_check_branch
      %23 = sbr.rel (0) target = $region9
    $region8: #{tpu_custom_call.1} parent=1 // pred_region
      _
    $region9: #{tpu_custom_call.1} parent=1 // pred_fallthru
      _
    // Predicated region
    $region10: #{tpu_custom_call.1} parent=1 // pred_check
      _
    $region11: #{tpu_custom_call.1} parent=1 // pred_check_branch
      %25 = sbr.rel (0) target = $region13
    $region12: #{tpu_custom_call.1} parent=1 // pred_region
      _
    $region13: #{tpu_custom_call.1} parent=1 // pred_fallthru
      _
    // Predicated region
    $region14: #{tpu_custom_call.1} parent=1 // pred_check
      _
    $region15: #{tpu_custom_call.1} parent=1 // pred_check_branch
      %27 = sbr.rel (0) target = $region17
    $region16: #{tpu_custom_call.1} parent=1 // pred_region
      %28 = dma.done [#allocation3], 16384
    $region17: #{tpu_custom_call.1} parent=1 // pred_fallthru
      _
    %v29 = vld [vmem:[#allocation2] sm:$0xff]
    %v30 = vld [vmem:[#allocation2 + $0x8] sm:$0xff]
    %v31 = vld [vmem:[#allocation2 + $0x10] sm:$0xff]
    %v32 = vld [vmem:[#allocation2 + $0x18] sm:$0xff]
    %v33 = vld [vmem:[#allocation2 + $0x20] sm:$0xff]
    %v34 = vld [vmem:[#allocation2 + $0x28] sm:$0xff]
    %v35 = vld [vmem:[#allocation2 + $0x30] sm:$0xff]
    %v36 = vld [vmem:[#allocation2 + $0x38] sm:$0xff]
    %v37 = vld [vmem:[#allocation2 + $0x40] sm:$0xff]
    %v38 = vld [vmem:[#allocation2 + $0x48] sm:$0xff]
    %v39 = vld [vmem:[#allocation2 + $0x50] sm:$0xff]
    %v40 = vld [vmem:[#allocation2 + $0x58] sm:$0xff]
    %v41 = vld [vmem:[#allocation2 + $0x60] sm:$0xff]
    %v42 = vld [vmem:[#allocation2 + $0x68] sm:$0xff]
    %v43 = vld [vmem:[#allocation2 + $0x70] sm:$0xff]
    %v44 = vld [vmem:[#allocation2 + $0x78] sm:$0xff]
    %v45 = vld [vmem:[#allocation2 + $0x80] sm:$0xff]
    %v46 = vld [vmem:[#allocation2 + $0x88] sm:$0xff]
    %v47 = vld [vmem:[#allocation2 + $0x90] sm:$0xff]
    %v48 = vld [vmem:[#allocation2 + $0x98] sm:$0xff]
    %v49 = vld [vmem:[#allocation2 + $0xa0] sm:$0xff]
    %v50 = vld [vmem:[#allocation2 + $0xa8] sm:$0xff]
    %v51 = vld [vmem:[#allocation2 + $0xb0] sm:$0xff]
    %v52 = vld [vmem:[#allocation2 + $0xb8] sm:$0xff]
    %v53 = vld [vmem:[#allocation2 + $0xc0] sm:$0xff]
    %v54 = vld [vmem:[#allocation2 + $0xc8] sm:$0xff]
    %v55 = vld [vmem:[#allocation2 + $0xd0] sm:$0xff]
    %v56 = vld [vmem:[#allocation2 + $0xd8] sm:$0xff]
    %v57 = vld [vmem:[#allocation2 + $0xe0] sm:$0xff]
    %v58 = vld [vmem:[#allocation2 + $0xe8] sm:$0xff]
    %v59 = vld [vmem:[#allocation2 + $0xf0] sm:$0xff]
    %v60 = vld [vmem:[#allocation2 + $0xf8] sm:$0xff]
    %v61 = vld [vmem:[#allocation2 + $0x100] sm:$0xff]
    %v62 = vld [vmem:[#allocation2 + $0x108] sm:$0xff]
    %v63 = vld [vmem:[#allocation2 + $0x110] sm:$0xff]
    %v64 = vld [vmem:[#allocation2 + $0x118] sm:$0xff]
    %v65 = vld [vmem:[#allocation2 + $0x120] sm:$0xff]
    %v66 = vld [vmem:[#allocation2 + $0x128] sm:$0xff]
    %v67 = vld [vmem:[#allocation2 + $0x130] sm:$0xff]
    %v68 = vld [vmem:[#allocation2 + $0x138] sm:$0xff]
    %v69 = vld [vmem:[#allocation2 + $0x140] sm:$0xff]
    %v70 = vld [vmem:[#allocation2 + $0x148] sm:$0xff]
    %v71 = vld [vmem:[#allocation2 + $0x150] sm:$0xff]
    %v72 = vld [vmem:[#allocation2 + $0x158] sm:$0xff]
    %v73 = vld [vmem:[#allocation2 + $0x160] sm:$0xff]
    %v74 = vld [vmem:[#allocation2 + $0x168] sm:$0xff]
    %v75 = vld [vmem:[#allocation2 + $0x170] sm:$0xff]
    %v76 = vld [vmem:[#allocation2 + $0x178] sm:$0xff]
    %v77 = vld [vmem:[#allocation2 + $0x180] sm:$0xff]
    %v78 = vld [vmem:[#allocation2 + $0x188] sm:$0xff]
    %v79 = vld [vmem:[#allocation2 + $0x190] sm:$0xff]
    %v80 = vld [vmem:[#allocation2 + $0x198] sm:$0xff]
    %v81 = vld [vmem:[#allocation2 + $0x1a0] sm:$0xff]
    %v82 = vld [vmem:[#allocation2 + $0x1a8] sm:$0xff]
    %v83 = vld [vmem:[#allocation2 + $0x1b0] sm:$0xff]
    %v84 = vld [vmem:[#allocation2 + $0x1b8] sm:$0xff]
    %v85 = vld [vmem:[#allocation2 + $0x1c0] sm:$0xff]
    %v86 = vld [vmem:[#allocation2 + $0x1c8] sm:$0xff]
    %v87 = vld [vmem:[#allocation2 + $0x1d0] sm:$0xff]
    %v88 = vld [vmem:[#allocation2 + $0x1d8] sm:$0xff]
    %v89 = vld [vmem:[#allocation2 + $0x1e0] sm:$0xff]
    %v90 = vld [vmem:[#allocation2 + $0x1e8] sm:$0xff]
    %v91 = vld [vmem:[#allocation2 + $0x1f0] sm:$0xff]
    %v92 = vld [vmem:[#allocation2 + $0x1f8] sm:$0xff]
    %v93 = vld [vmem:[#allocation2 + $0x200] sm:$0xff]
    %v94 = vld [vmem:[#allocation2 + $0x208] sm:$0xff]
    %v95 = vld [vmem:[#allocation2 + $0x210] sm:$0xff]
    %v96 = vld [vmem:[#allocation2 + $0x218] sm:$0xff]
    %v97 = vld [vmem:[#allocation2 + $0x220] sm:$0xff]
    %v98 = vld [vmem:[#allocation2 + $0x228] sm:$0xff]
    %v99 = vld [vmem:[#allocation2 + $0x230] sm:$0xff]
    %v100 = vld [vmem:[#allocation2 + $0x238] sm:$0xff]
    %v101 = vld [vmem:[#allocation2 + $0x240] sm:$0xff]
    %v102 = vld [vmem:[#allocation2 + $0x248] sm:$0xff]
    %v103 = vld [vmem:[#allocation2 + $0x250] sm:$0xff]
    %v104 = vld [vmem:[#allocation2 + $0x258] sm:$0xff]
    %v105 = vld [vmem:[#allocation2 + $0x260] sm:$0xff]
    %v106 = vld [vmem:[#allocation2 + $0x268] sm:$0xff]
    %v107 = vld [vmem:[#allocation2 + $0x270] sm:$0xff]
    %v108 = vld [vmem:[#allocation2 + $0x278] sm:$0xff]
    %v109 = vld [vmem:[#allocation2 + $0x280] sm:$0xff]
    %v110 = vld [vmem:[#allocation2 + $0x288] sm:$0xff]
    %v111 = vld [vmem:[#allocation2 + $0x290] sm:$0xff]
    %v112 = vld [vmem:[#allocation2 + $0x298] sm:$0xff]
    %v113 = vld [vmem:[#allocation2 + $0x2a0] sm:$0xff]
    %v114 = vld [vmem:[#allocation2 + $0x2a8] sm:$0xff]
    %v115 = vld [vmem:[#allocation2 + $0x2b0] sm:$0xff]
    %v116 = vld [vmem:[#allocation2 + $0x2b8] sm:$0xff]
    %v117 = vld [vmem:[#allocation2 + $0x2c0] sm:$0xff]
    %v118 = vld [vmem:[#allocation2 + $0x2c8] sm:$0xff]
    %v119 = vld [vmem:[#allocation2 + $0x2d0] sm:$0xff]
    %v120 = vld [vmem:[#allocation2 + $0x2d8] sm:$0xff]
    %v121 = vld [vmem:[#allocation2 + $0x2e0] sm:$0xff]
    %v122 = vld [vmem:[#allocation2 + $0x2e8] sm:$0xff]
    %v123 = vld [vmem:[#allocation2 + $0x2f0] sm:$0xff]
    %v124 = vld [vmem:[#allocation2 + $0x2f8] sm:$0xff]
    %v125 = vld [vmem:[#allocation2 + $0x300] sm:$0xff]
    %v126 = vld [vmem:[#allocation2 + $0x308] sm:$0xff]
    %v127 = vld [vmem:[#allocation2 + $0x310] sm:$0xff]
    %v128 = vld [vmem:[#allocation2 + $0x318] sm:$0xff]
    %v129 = vld [vmem:[#allocation2 + $0x320] sm:$0xff]
    %v130 = vld [vmem:[#allocation2 + $0x328] sm:$0xff]
    %v131 = vld [vmem:[#allocation2 + $0x330] sm:$0xff]
    %v132 = vld [vmem:[#allocation2 + $0x338] sm:$0xff]
    %v133 = vld [vmem:[#allocation2 + $0x340] sm:$0xff]
    %v134 = vld [vmem:[#allocation2 + $0x348] sm:$0xff]
    %v135 = vld [vmem:[#allocation2 + $0x350] sm:$0xff]
    %v136 = vld [vmem:[#allocation2 + $0x358] sm:$0xff]
    %v137 = vld [vmem:[#allocation2 + $0x360] sm:$0xff]
    %v138 = vld [vmem:[#allocation2 + $0x368] sm:$0xff]
    %v139 = vld [vmem:[#allocation2 + $0x370] sm:$0xff]
    %v140 = vld [vmem:[#allocation2 + $0x378] sm:$0xff]
    %v141 = vld [vmem:[#allocation2 + $0x380] sm:$0xff]
    %v142 = vld [vmem:[#allocation2 + $0x388] sm:$0xff]
    %v143 = vld [vmem:[#allocation2 + $0x390] sm:$0xff]
    %v144 = vld [vmem:[#allocation2 + $0x398] sm:$0xff]
    %v145 = vld [vmem:[#allocation2 + $0x3a0] sm:$0xff]
    %v146 = vld [vmem:[#allocation2 + $0x3a8] sm:$0xff]
    %v147 = vld [vmem:[#allocation2 + $0x3b0] sm:$0xff]
    %v148 = vld [vmem:[#allocation2 + $0x3b8] sm:$0xff]
    %v149 = vld [vmem:[#allocation2 + $0x3c0] sm:$0xff]
    %v150 = vld [vmem:[#allocation2 + $0x3c8] sm:$0xff]
    %v151 = vld [vmem:[#allocation2 + $0x3d0] sm:$0xff]
    %v152 = vld [vmem:[#allocation2 + $0x3d8] sm:$0xff]
    %v153 = vld [vmem:[#allocation2 + $0x3e0] sm:$0xff]
    %v154 = vld [vmem:[#allocation2 + $0x3e8] sm:$0xff]
    %v155 = vld [vmem:[#allocation2 + $0x3f0] sm:$0xff]
    %v156 = vld [vmem:[#allocation2 + $0x3f8] sm:$0xff]
    %v157 = vadd.f32 %v29, %v30
    %158 = vadd.xlane.f32.xlu0 %v157
    %v159 = vpop.xlane.xlu0 %158
    %v160 = vadd.f32 %v31, %v32
    %161 = vadd.xlane.f32.xlu0 %v160
    %v162 = vpop.xlane.xlu0 %161
    %v163 = vadd.f32 %v33, %v34
    %164 = vadd.xlane.f32.xlu0 %v163
    %v165 = vpop.xlane.xlu0 %164
    %v166 = vadd.f32 %v35, %v36
    %167 = vadd.xlane.f32.xlu0 %v166
    %v168 = vpop.xlane.xlu0 %167
    %v169 = vadd.f32 %v37, %v38
    %170 = vadd.xlane.f32.xlu0 %v169
    %v171 = vpop.xlane.xlu0 %170
    %v172 = vadd.f32 %v39, %v40
    %173 = vadd.xlane.f32.xlu0 %v172
    %v174 = vpop.xlane.xlu0 %173
    %v175 = vadd.f32 %v41, %v42
    %176 = vadd.xlane.f32.xlu0 %v175
    %v177 = vpop.xlane.xlu0 %176
    %v178 = vadd.f32 %v43, %v44
    %179 = vadd.xlane.f32.xlu0 %v178
    %v180 = vpop.xlane.xlu0 %179
    %v181 = vadd.f32 %v45, %v46
    %182 = vadd.xlane.f32.xlu0 %v181
    %v183 = vpop.xlane.xlu0 %182
    %v184 = vadd.f32 %v47, %v48
    %185 = vadd.xlane.f32.xlu0 %v184
    %v186 = vpop.xlane.xlu0 %185
    %v187 = vadd.f32 %v49, %v50
    %188 = vadd.xlane.f32.xlu0 %v187
    %v189 = vpop.xlane.xlu0 %188
    %v190 = vadd.f32 %v51, %v52
    %191 = vadd.xlane.f32.xlu0 %v190
    %v192 = vpop.xlane.xlu0 %191
    %v193 = vadd.f32 %v53, %v54
    %194 = vadd.xlane.f32.xlu0 %v193
    %v195 = vpop.xlane.xlu0 %194
    %v196 = vadd.f32 %v55, %v56
    %197 = vadd.xlane.f32.xlu0 %v196
    %v198 = vpop.xlane.xlu0 %197
    %v199 = vadd.f32 %v57, %v58
    %200 = vadd.xlane.f32.xlu0 %v199
    %v201 = vpop.xlane.xlu0 %200
    %v202 = vadd.f32 %v59, %v60
    %203 = vadd.xlane.f32.xlu0 %v202
    %v204 = vpop.xlane.xlu0 %203
    %v205 = vadd.f32 %v61, %v62
    %206 = vadd.xlane.f32.xlu0 %v205
    %v207 = vpop.xlane.xlu0 %206
    %v208 = vadd.f32 %v63, %v64
    %209 = vadd.xlane.f32.xlu0 %v208
    %v210 = vpop.xlane.xlu0 %209
    %v211 = vadd.f32 %v65, %v66
    %212 = vadd.xlane.f32.xlu0 %v211
    %v213 = vpop.xlane.xlu0 %212
    %v214 = vadd.f32 %v67, %v68
    %215 = vadd.xlane.f32.xlu0 %v214
    %v216 = vpop.xlane.xlu0 %215
    %v217 = vadd.f32 %v69, %v70
    %218 = vadd.xlane.f32.xlu0 %v217
    %v219 = vpop.xlane.xlu0 %218
    %v220 = vadd.f32 %v71, %v72
    %221 = vadd.xlane.f32.xlu0 %v220
    %v222 = vpop.xlane.xlu0 %221
    %v223 = vadd.f32 %v73, %v74
    %224 = vadd.xlane.f32.xlu0 %v223
    %v225 = vpop.xlane.xlu0 %224
    %v226 = vadd.f32 %v75, %v76
    %227 = vadd.xlane.f32.xlu0 %v226
    %v228 = vpop.xlane.xlu0 %227
    %v229 = vadd.f32 %v77, %v78
    %230 = vadd.xlane.f32.xlu0 %v229
    %v231 = vpop.xlane.xlu0 %230
    %v232 = vadd.f32 %v79, %v80
    %233 = vadd.xlane.f32.xlu0 %v232
    %v234 = vpop.xlane.xlu0 %233
    %v235 = vadd.f32 %v81, %v82
    %236 = vadd.xlane.f32.xlu0 %v235
    %v237 = vpop.xlane.xlu0 %236
    %v238 = vadd.f32 %v83, %v84
    %239 = vadd.xlane.f32.xlu0 %v238
    %v240 = vpop.xlane.xlu0 %239
    %v241 = vadd.f32 %v85, %v86
    %242 = vadd.xlane.f32.xlu0 %v241
    %v243 = vpop.xlane.xlu0 %242
    %v244 = vadd.f32 %v87, %v88
    %245 = vadd.xlane.f32.xlu0 %v244
    %v246 = vpop.xlane.xlu0 %245
    %v247 = vadd.f32 %v89, %v90
    %248 = vadd.xlane.f32.xlu0 %v247
    %v249 = vpop.xlane.xlu0 %248
    %v250 = vadd.f32 %v91, %v92
    %251 = vadd.xlane.f32.xlu0 %v250
    %v252 = vpop.xlane.xlu0 %251
    %v253 = vadd.f32 %v93, %v94
    %254 = vadd.xlane.f32.xlu0 %v253
    %v255 = vpop.xlane.xlu0 %254
    %v256 = vadd.f32 %v95, %v96
    %257 = vadd.xlane.f32.xlu0 %v256
    %v258 = vpop.xlane.xlu0 %257
    %v259 = vadd.f32 %v97, %v98
    %260 = vadd.xlane.f32.xlu0 %v259
    %v261 = vpop.xlane.xlu0 %260
    %v262 = vadd.f32 %v99, %v100
    %263 = vadd.xlane.f32.xlu0 %v262
    %v264 = vpop.xlane.xlu0 %263
    %v265 = vadd.f32 %v101, %v102
    %266 = vadd.xlane.f32.xlu0 %v265
    %v267 = vpop.xlane.xlu0 %266
    %v268 = vadd.f32 %v103, %v104
    %269 = vadd.xlane.f32.xlu0 %v268
    %v270 = vpop.xlane.xlu0 %269
    %v271 = vadd.f32 %v105, %v106
    %272 = vadd.xlane.f32.xlu0 %v271
    %v273 = vpop.xlane.xlu0 %272
    %v274 = vadd.f32 %v107, %v108
    %275 = vadd.xlane.f32.xlu0 %v274
    %v276 = vpop.xlane.xlu0 %275
    %v277 = vadd.f32 %v109, %v110
    %278 = vadd.xlane.f32.xlu0 %v277
    %v279 = vpop.xlane.xlu0 %278
    %v280 = vadd.f32 %v111, %v112
    %281 = vadd.xlane.f32.xlu0 %v280
    %v282 = vpop.xlane.xlu0 %281
    %v283 = vadd.f32 %v113, %v114
    %284 = vadd.xlane.f32.xlu0 %v283
    %v285 = vpop.xlane.xlu0 %284
    %v286 = vadd.f32 %v115, %v116
    %287 = vadd.xlane.f32.xlu0 %v286
    %v288 = vpop.xlane.xlu0 %287
    %v289 = vadd.f32 %v117, %v118
    %290 = vadd.xlane.f32.xlu0 %v289
    %v291 = vpop.xlane.xlu0 %290
    %v292 = vadd.f32 %v119, %v120
    %293 = vadd.xlane.f32.xlu0 %v292
    %v294 = vpop.xlane.xlu0 %293
    %v295 = vadd.f32 %v121, %v122
    %296 = vadd.xlane.f32.xlu0 %v295
    %v297 = vpop.xlane.xlu0 %296
    %v298 = vadd.f32 %v123, %v124
    %299 = vadd.xlane.f32.xlu0 %v298
    %v300 = vpop.xlane.xlu0 %299
    %v301 = vadd.f32 %v125, %v126
    %302 = vadd.xlane.f32.xlu0 %v301
    %v303 = vpop.xlane.xlu0 %302
    %v304 = vadd.f32 %v127, %v128
    %305 = vadd.xlane.f32.xlu0 %v304
    %v306 = vpop.xlane.xlu0 %305
    %v307 = vadd.f32 %v129, %v130
    %308 = vadd.xlane.f32.xlu0 %v307
    %v309 = vpop.xlane.xlu0 %308
    %v310 = vadd.f32 %v131, %v132
    %311 = vadd.xlane.f32.xlu0 %v310
    %v312 = vpop.xlane.xlu0 %311
    %v313 = vadd.f32 %v133, %v134
    %314 = vadd.xlane.f32.xlu0 %v313
    %v315 = vpop.xlane.xlu0 %314
    %v316 = vadd.f32 %v135, %v136
    %317 = vadd.xlane.f32.xlu0 %v316
    %v318 = vpop.xlane.xlu0 %317
    %v319 = vadd.f32 %v137, %v138
    %320 = vadd.xlane.f32.xlu0 %v319
    %v321 = vpop.xlane.xlu0 %320
    %v322 = vadd.f32 %v139, %v140
    %323 = vadd.xlane.f32.xlu0 %v322
    %v324 = vpop.xlane.xlu0 %323
    %v325 = vadd.f32 %v141, %v142
    %326 = vadd.xlane.f32.xlu0 %v325
    %v327 = vpop.xlane.xlu0 %326
    %v328 = vadd.f32 %v143, %v144
    %329 = vadd.xlane.f32.xlu0 %v328
    %v330 = vpop.xlane.xlu0 %329
    %v331 = vadd.f32 %v145, %v146
    %332 = vadd.xlane.f32.xlu0 %v331
    %v333 = vpop.xlane.xlu0 %332
    %v334 = vadd.f32 %v147, %v148
    %335 = vadd.xlane.f32.xlu0 %v334
    %v336 = vpop.xlane.xlu0 %335
    %v337 = vadd.f32 %v149, %v150
    %338 = vadd.xlane.f32.xlu0 %v337
    %v339 = vpop.xlane.xlu0 %338
    %v340 = vadd.f32 %v151, %v152
    %341 = vadd.xlane.f32.xlu0 %v340
    %v342 = vpop.xlane.xlu0 %341
    %v343 = vadd.f32 %v153, %v154
    %344 = vadd.xlane.f32.xlu0 %v343
    %v345 = vpop.xlane.xlu0 %344
    %v346 = vadd.f32 %v155, %v156
    %347 = vadd.xlane.f32.xlu0 %v346
    %v348 = vpop.xlane.xlu0 %347
    %v349 = vmul.f32 %v159, 0.00390625
    %v350 = vmul.f32 %v162, 0.00390625
    %v351 = vmul.f32 %v165, 0.00390625
    %v352 = vmul.f32 %v168, 0.00390625
    %v353 = vmul.f32 %v171, 0.00390625
    %v354 = vmul.f32 %v174, 0.00390625
    %v355 = vmul.f32 %v177, 0.00390625
    %v356 = vmul.f32 %v180, 0.00390625
    %v357 = vmul.f32 %v183, 0.00390625
    %v358 = vmul.f32 %v186, 0.00390625
    %v359 = vmul.f32 %v189, 0.00390625
    %v360 = vmul.f32 %v192, 0.00390625
    %v361 = vmul.f32 %v195, 0.00390625
    %v362 = vmul.f32 %v198, 0.00390625
    %v363 = vmul.f32 %v201, 0.00390625
    %v364 = vmul.f32 %v204, 0.00390625
    %v365 = vmul.f32 %v207, 0.00390625
    %v366 = vmul.f32 %v210, 0.00390625
    %v367 = vmul.f32 %v213, 0.00390625
    %v368 = vmul.f32 %v216, 0.00390625
    %v369 = vmul.f32 %v219, 0.00390625
    %v370 = vmul.f32 %v222, 0.00390625
    %v371 = vmul.f32 %v225, 0.00390625
    %v372 = vmul.f32 %v228, 0.00390625
    %v373 = vmul.f32 %v231, 0.00390625
    %v374 = vmul.f32 %v234, 0.00390625
    %v375 = vmul.f32 %v237, 0.00390625
    %v376 = vmul.f32 %v240, 0.00390625
    %v377 = vmul.f32 %v243, 0.00390625
    %v378 = vmul.f32 %v246, 0.00390625
    %v379 = vmul.f32 %v249, 0.00390625
    %v380 = vmul.f32 %v252, 0.00390625
    %v381 = vmul.f32 %v255, 0.00390625
    %v382 = vmul.f32 %v258, 0.00390625
    %v383 = vmul.f32 %v261, 0.00390625
    %v384 = vmul.f32 %v264, 0.00390625
    %v385 = vmul.f32 %v267, 0.00390625
    %v386 = vmul.f32 %v270, 0.00390625
    %v387 = vmul.f32 %v273, 0.00390625
    %v388 = vmul.f32 %v276, 0.00390625
    %v389 = vmul.f32 %v279, 0.00390625
    %v390 = vmul.f32 %v282, 0.00390625
    %v391 = vmul.f32 %v285, 0.00390625
    %v392 = vmul.f32 %v288, 0.00390625
    %v393 = vmul.f32 %v291, 0.00390625
    %v394 = vmul.f32 %v294, 0.00390625
    %v395 = vmul.f32 %v297, 0.00390625
    %v396 = vmul.f32 %v300, 0.00390625
    %v397 = vmul.f32 %v303, 0.00390625
    %v398 = vmul.f32 %v306, 0.00390625
    %v399 = vmul.f32 %v309, 0.00390625
    %v400 = vmul.f32 %v312, 0.00390625
    %v401 = vmul.f32 %v315, 0.00390625
    %v402 = vmul.f32 %v318, 0.00390625
    %v403 = vmul.f32 %v321, 0.00390625
    %v404 = vmul.f32 %v324, 0.00390625
    %v405 = vmul.f32 %v327, 0.00390625
    %v406 = vmul.f32 %v330, 0.00390625
    %v407 = vmul.f32 %v333, 0.00390625
    %v408 = vmul.f32 %v336, 0.00390625
    %v409 = vmul.f32 %v339, 0.00390625
    %v410 = vmul.f32 %v342, 0.00390625
    %v411 = vmul.f32 %v345, 0.00390625
    %v412 = vmul.f32 %v348, 0.00390625
    %v413 = vld [vmem:[%s1] sm:$0xff]
    %v414 = vld [vmem:[%s1 + $0x8] sm:$0xff]
    %v415 = vld [vmem:[%s1 + $0x10] sm:$0xff]
    %v416 = vld [vmem:[%s1 + $0x18] sm:$0xff]
    %v417 = vld [vmem:[%s1 + $0x20] sm:$0xff]
    %v418 = vld [vmem:[%s1 + $0x28] sm:$0xff]
    %v419 = vld [vmem:[%s1 + $0x30] sm:$0xff]
    %v420 = vld [vmem:[%s1 + $0x38] sm:$0xff]
    %v421 = vld [vmem:[%s1 + $0x40] sm:$0xff]
    %v422 = vld [vmem:[%s1 + $0x48] sm:$0xff]
    %v423 = vld [vmem:[%s1 + $0x50] sm:$0xff]
    %v424 = vld [vmem:[%s1 + $0x58] sm:$0xff]
    %v425 = vld [vmem:[%s1 + $0x60] sm:$0xff]
    %v426 = vld [vmem:[%s1 + $0x68] sm:$0xff]
    %v427 = vld [vmem:[%s1 + $0x70] sm:$0xff]
    %v428 = vld [vmem:[%s1 + $0x78] sm:$0xff]
    %v493 = vlaneseq
    %v494 = vand.u32 %v493, 127
    %v495 = vlaneseq
    %v496 = vshrl.u32 %v495, 7
    %v497 = vsub.s32 %v494, %v496
    %v498 = vrot.slane %v349, %v497
    %v499 = vadd.s32 %v494, 4294967288
    %v500 = vlaneseq
    %v501 = vshrl.u32 %v500, 7
    %v502 = vsub.s32 %v499, %v501
    %v503 = vrot.slane %v350, %v502
    %vm504 = vcmask 130112
    %v505 = vsel %vm504, %v503, %v498
    %v506 = vadd.s32 %v494, 4294967280
    %v507 = vlaneseq
    %v508 = vshrl.u32 %v507, 7
    %v509 = vsub.s32 %v506, %v508
    %v510 = vrot.slane %v351, %v509
    %vm511 = vcmask 195712
    %v512 = vsel %vm511, %v510, %v505
    %v513 = vadd.s32 %v494, 4294967272
    %v514 = vlaneseq
    %v515 = vshrl.u32 %v514, 7
    %v516 = vsub.s32 %v513, %v515
    %v517 = vrot.slane %v352, %v516
    %vm518 = vcmask 261312
    %v519 = vsel %vm518, %v517, %v512
    %v520 = vadd.s32 %v494, 4294967264
    %v521 = vlaneseq
    %v522 = vshrl.u32 %v521, 7
    %v523 = vsub.s32 %v520, %v522
    %v524 = vrot.slane %v353, %v523
    %vm525 = vcmask 326912
    %v526 = vsel %vm525, %v524, %v519
    %v527 = vadd.s32 %v494, 4294967256
    %v528 = vlaneseq
    %v529 = vshrl.u32 %v528, 7
    %v530 = vsub.s32 %v527, %v529
    %v531 = vrot.slane %v354, %v530
    %vm532 = vcmask 392512
    %v533 = vsel %vm532, %v531, %v526
    %v534 = vadd.s32 %v494, 4294967248
    %v535 = vlaneseq
    %v536 = vshrl.u32 %v535, 7
    %v537 = vsub.s32 %v534, %v536
    %v538 = vrot.slane %v355, %v537
    %vm539 = vcmask 458112
    %v540 = vsel %vm539, %v538, %v533
    %v541 = vadd.s32 %v494, 4294967240
    %v542 = vlaneseq
    %v543 = vshrl.u32 %v542, 7
    %v544 = vsub.s32 %v541, %v543
    %v545 = vrot.slane %v356, %v544
    %vm546 = vcmask 523712
    %v547 = vsel %vm546, %v545, %v540
    %v548 = vadd.s32 %v494, 4294967232
    %v549 = vlaneseq
    %v550 = vshrl.u32 %v549, 7
    %v551 = vsub.s32 %v548, %v550
    %v552 = vrot.slane %v357, %v551
    %vm553 = vcmask 589312
    %v554 = vsel %vm553, %v552, %v547
    %v555 = vadd.s32 %v494, 4294967224
    %v556 = vlaneseq
    %v557 = vshrl.u32 %v556, 7
    %v558 = vsub.s32 %v555, %v557
    %v559 = vrot.slane %v358, %v558
    %vm560 = vcmask 654912
    %v561 = vsel %vm560, %v559, %v554
    %v562 = vadd.s32 %v494, 4294967216
    %v563 = vlaneseq
    %v564 = vshrl.u32 %v563, 7
    %v565 = vsub.s32 %v562, %v564
    %v566 = vrot.slane %v359, %v565
    %vm567 = vcmask 720512
    %v568 = vsel %vm567, %v566, %v561
    %v569 = vadd.s32 %v494, 4294967208
    %v570 = vlaneseq
    %v571 = vshrl.u32 %v570, 7
    %v572 = vsub.s32 %v569, %v571
    %v573 = vrot.slane %v360, %v572
    %vm574 = vcmask 786112
    %v575 = vsel %vm574, %v573, %v568
    %v576 = vadd.s32 %v494, 4294967200
    %v577 = vlaneseq
    %v578 = vshrl.u32 %v577, 7
    %v579 = vsub.s32 %v576, %v578
    %v580 = vrot.slane %v361, %v579
    %vm581 = vcmask 851712
    %v582 = vsel %vm581, %v580, %v575
    %v583 = vadd.s32 %v494, 4294967192
    %v584 = vlaneseq
    %v585 = vshrl.u32 %v584, 7
    %v586 = vsub.s32 %v583, %v585
    %v587 = vrot.slane %v362, %v586
    %vm588 = vcmask 917312
    %v589 = vsel %vm588, %v587, %v582
    %v590 = vadd.s32 %v494, 4294967184
    %v591 = vlaneseq
    %v592 = vshrl.u32 %v591, 7
    %v593 = vsub.s32 %v590, %v592
    %v594 = vrot.slane %v363, %v593
    %vm595 = vcmask 982912
    %v596 = vsel %vm595, %v594, %v589
    %v597 = vadd.s32 %v494, 4294967176
    %v598 = vlaneseq
    %v599 = vshrl.u32 %v598, 7
    %v600 = vsub.s32 %v597, %v599
    %v601 = vrot.slane %v364, %v600
    %vm602 = vcmask 1048512
    %v603 = vsel %vm602, %v601, %v596
    %v604 = vlaneseq
    %v605 = vshrl.u32 %v604, 7
    %v606 = vsub.s32 %v494, %v605
    %v607 = vrot.slane %v365, %v606
    %v608 = vlaneseq
    %v609 = vshrl.u32 %v608, 7
    %v610 = vsub.s32 %v499, %v609
    %v611 = vrot.slane %v366, %v610
    %v612 = vsel %vm504, %v611, %v607
    %v613 = vlaneseq
    %v614 = vshrl.u32 %v613, 7
    %v615 = vsub.s32 %v506, %v614
    %v616 = vrot.slane %v367, %v615
    %v617 = vsel %vm511, %v616, %v612
    %v618 = vlaneseq
    %v619 = vshrl.u32 %v618, 7
    %v620 = vsub.s32 %v513, %v619
    %v621 = vrot.slane %v368, %v620
    %v622 = vsel %vm518, %v621, %v617
    %v623 = vlaneseq
    %v624 = vshrl.u32 %v623, 7
    %v625 = vsub.s32 %v520, %v624
    %v626 = vrot.slane %v369, %v625
    %v627 = vsel %vm525, %v626, %v622
    %v628 = vlaneseq
    %v629 = vshrl.u32 %v628, 7
    %v630 = vsub.s32 %v527, %v629
    %v631 = vrot.slane %v370, %v630
    %v632 = vsel %vm532, %v631, %v627
    %v633 = vlaneseq
    %v634 = vshrl.u32 %v633, 7
    %v635 = vsub.s32 %v534, %v634
    %v636 = vrot.slane %v371, %v635
    %v637 = vsel %vm539, %v636, %v632
    %v638 = vlaneseq
    %v639 = vshrl.u32 %v638, 7
    %v640 = vsub.s32 %v541, %v639
    %v641 = vrot.slane %v372, %v640
    %v642 = vsel %vm546, %v641, %v637
    %v643 = vlaneseq
    %v644 = vshrl.u32 %v643, 7
    %v645 = vsub.s32 %v548, %v644
    %v646 = vrot.slane %v373, %v645
    %v647 = vsel %vm553, %v646, %v642
    %v648 = vlaneseq
    %v649 = vshrl.u32 %v648, 7
    %v650 = vsub.s32 %v555, %v649
    %v651 = vrot.slane %v374, %v650
    %v652 = vsel %vm560, %v651, %v647
    %v653 = vlaneseq
    %v654 = vshrl.u32 %v653, 7
    %v655 = vsub.s32 %v562, %v654
    %v656 = vrot.slane %v375, %v655
    %v657 = vsel %vm567, %v656, %v652
    %v658 = vlaneseq
    %v659 = vshrl.u32 %v658, 7
    %v660 = vsub.s32 %v569, %v659
    %v661 = vrot.slane %v376, %v660
    %v662 = vsel %vm574, %v661, %v657
    %v663 = vlaneseq
    %v664 = vshrl.u32 %v663, 7
    %v665 = vsub.s32 %v576, %v664
    %v666 = vrot.slane %v377, %v665
    %v667 = vsel %vm581, %v666, %v662
    %v668 = vlaneseq
    %v669 = vshrl.u32 %v668, 7
    %v670 = vsub.s32 %v583, %v669
    %v671 = vrot.slane %v378, %v670
    %v672 = vsel %vm588, %v671, %v667
    %v673 = vlaneseq
    %v674 = vshrl.u32 %v673, 7
    %v675 = vsub.s32 %v590, %v674
    %v676 = vrot.slane %v379, %v675
    %v677 = vsel %vm595, %v676, %v672
    %v678 = vlaneseq
    %v679 = vshrl.u32 %v678, 7
    %v680 = vsub.s32 %v597, %v679
    %v681 = vrot.slane %v380, %v680
    %v682 = vsel %vm602, %v681, %v677
    %v683 = vlaneseq
    %v684 = vshrl.u32 %v683, 7
    %v685 = vsub.s32 %v494, %v684
    %v686 = vrot.slane %v381, %v685
    %v687 = vlaneseq
    %v688 = vshrl.u32 %v687, 7
    %v689 = vsub.s32 %v499, %v688
    %v690 = vrot.slane %v382, %v689
    %v691 = vsel %vm504, %v690, %v686
    %v692 = vlaneseq
    %v693 = vshrl.u32 %v692, 7
    %v694 = vsub.s32 %v506, %v693
    %v695 = vrot.slane %v383, %v694
    %v696 = vsel %vm511, %v695, %v691
    %v697 = vlaneseq
    %v698 = vshrl.u32 %v697, 7
    %v699 = vsub.s32 %v513, %v698
    %v700 = vrot.slane %v384, %v699
    %v701 = vsel %vm518, %v700, %v696
    %v702 = vlaneseq
    %v703 = vshrl.u32 %v702, 7
    %v704 = vsub.s32 %v520, %v703
    %v705 = vrot.slane %v385, %v704
    %v706 = vsel %vm525, %v705, %v701
    %v707 = vlaneseq
    %v708 = vshrl.u32 %v707, 7
    %v709 = vsub.s32 %v527, %v708
    %v710 = vrot.slane %v386, %v709
    %v711 = vsel %vm532, %v710, %v706
    %v712 = vlaneseq
    %v713 = vshrl.u32 %v712, 7
    %v714 = vsub.s32 %v534, %v713
    %v715 = vrot.slane %v387, %v714
    %v716 = vsel %vm539, %v715, %v711
    %v717 = vlaneseq
    %v718 = vshrl.u32 %v717, 7
    %v719 = vsub.s32 %v541, %v718
    %v720 = vrot.slane %v388, %v719
    %v721 = vsel %vm546, %v720, %v716
    %v722 = vlaneseq
    %v723 = vshrl.u32 %v722, 7
    %v724 = vsub.s32 %v548, %v723
    %v725 = vrot.slane %v389, %v724
    %v726 = vsel %vm553, %v725, %v721
    %v727 = vlaneseq
    %v728 = vshrl.u32 %v727, 7
    %v729 = vsub.s32 %v555, %v728
    %v730 = vrot.slane %v390, %v729
    %v731 = vsel %vm560, %v730, %v726
    %v732 = vlaneseq
    %v733 = vshrl.u32 %v732, 7
    %v734 = vsub.s32 %v562, %v733
    %v735 = vrot.slane %v391, %v734
    %v736 = vsel %vm567, %v735, %v731
    %v737 = vlaneseq
    %v738 = vshrl.u32 %v737, 7
    %v739 = vsub.s32 %v569, %v738
    %v740 = vrot.slane %v392, %v739
    %v741 = vsel %vm574, %v740, %v736
    %v742 = vlaneseq
    %v743 = vshrl.u32 %v742, 7
    %v744 = vsub.s32 %v576, %v743
    %v745 = vrot.slane %v393, %v744
    %v746 = vsel %vm581, %v745, %v741
    %v747 = vlaneseq
    %v748 = vshrl.u32 %v747, 7
    %v749 = vsub.s32 %v583, %v748
    %v750 = vrot.slane %v394, %v749
    %v751 = vsel %vm588, %v750, %v746
    %v752 = vlaneseq
    %v753 = vshrl.u32 %v752, 7
    %v754 = vsub.s32 %v590, %v753
    %v755 = vrot.slane %v395, %v754
    %v756 = vsel %vm595, %v755, %v751
    %v757 = vlaneseq
    %v758 = vshrl.u32 %v757, 7
    %v759 = vsub.s32 %v597, %v758
    %v760 = vrot.slane %v396, %v759
    %v761 = vsel %vm602, %v760, %v756
    %v762 = vlaneseq
    %v763 = vshrl.u32 %v762, 7
    %v764 = vsub.s32 %v494, %v763
    %v765 = vrot.slane %v397, %v764
    %v766 = vlaneseq
    %v767 = vshrl.u32 %v766, 7
    %v768 = vsub.s32 %v499, %v767
    %v769 = vrot.slane %v398, %v768
    %v770 = vsel %vm504, %v769, %v765
    %v771 = vlaneseq
    %v772 = vshrl.u32 %v771, 7
    %v773 = vsub.s32 %v506, %v772
    %v774 = vrot.slane %v399, %v773
    %v775 = vsel %vm511, %v774, %v770
    %v776 = vlaneseq
    %v777 = vshrl.u32 %v776, 7
    %v778 = vsub.s32 %v513, %v777
    %v779 = vrot.slane %v400, %v778
    %v780 = vsel %vm518, %v779, %v775
    %v781 = vlaneseq
    %v782 = vshrl.u32 %v781, 7
    %v783 = vsub.s32 %v520, %v782
    %v784 = vrot.slane %v401, %v783
    %v785 = vsel %vm525, %v784, %v780
    %v786 = vlaneseq
    %v787 = vshrl.u32 %v786, 7
    %v788 = vsub.s32 %v527, %v787
    %v789 = vrot.slane %v402, %v788
    %v790 = vsel %vm532, %v789, %v785
    %v791 = vlaneseq
    %v792 = vshrl.u32 %v791, 7
    %v793 = vsub.s32 %v534, %v792
    %v794 = vrot.slane %v403, %v793
    %v795 = vsel %vm539, %v794, %v790
    %v796 = vlaneseq
    %v797 = vshrl.u32 %v796, 7
    %v798 = vsub.s32 %v541, %v797
    %v799 = vrot.slane %v404, %v798
    %v800 = vsel %vm546, %v799, %v795
    %v801 = vlaneseq
    %v802 = vshrl.u32 %v801, 7
    %v803 = vsub.s32 %v548, %v802
    %v804 = vrot.slane %v405, %v803
    %v805 = vsel %vm553, %v804, %v800
    %v806 = vlaneseq
    %v807 = vshrl.u32 %v806, 7
    %v808 = vsub.s32 %v555, %v807
    %v809 = vrot.slane %v406, %v808
    %v810 = vsel %vm560, %v809, %v805
    %v811 = vlaneseq
    %v812 = vshrl.u32 %v811, 7
    %v813 = vsub.s32 %v562, %v812
    %v814 = vrot.slane %v407, %v813
    %v815 = vsel %vm567, %v814, %v810
    %v816 = vlaneseq
    %v817 = vshrl.u32 %v816, 7
    %v818 = vsub.s32 %v569, %v817
    %v819 = vrot.slane %v408, %v818
    %v820 = vsel %vm574, %v819, %v815
    %v821 = vlaneseq
    %v822 = vshrl.u32 %v821, 7
    %v823 = vsub.s32 %v576, %v822
    %v824 = vrot.slane %v409, %v823
    %v825 = vsel %vm581, %v824, %v820
    %v826 = vlaneseq
    %v827 = vshrl.u32 %v826, 7
    %v828 = vsub.s32 %v583, %v827
    %v829 = vrot.slane %v410, %v828
    %v830 = vsel %vm588, %v829, %v825
    %v831 = vlaneseq
    %v832 = vshrl.u32 %v831, 7
    %v833 = vsub.s32 %v590, %v832
    %v834 = vrot.slane %v411, %v833
    %v835 = vsel %vm595, %v834, %v830
    %v836 = vlaneseq
    %v837 = vshrl.u32 %v836, 7
    %v838 = vsub.s32 %v597, %v837
    %v839 = vrot.slane %v412, %v838
    %v840 = vsel %vm602, %v839, %v835
    %vm841 = vcmask 1041409
    %v842 = vsel %vm841, %v682, %v603
    %vm843 = vcmask 1042434
    %v844 = vsel %vm843, %v761, %v842
    %vm845 = vcmask 1043459
    %v846 = vsel %vm845, %v840, %v844
    %848 = vmatprep.subr.mxu0 0.0
    %849 = vmatpush1.msra.mxu0 %v413
    %850 = vmatprep.subr.mxu0 0.0
    %851 = vmatpush1.msra.mxu0 %v414
    %852 = vmatprep.subr.mxu0 0.0
    %853 = vmatpush1.msra.mxu0 %v415
    %854 = vmatprep.subr.mxu0 0.0
    %855 = vmatpush1.msra.mxu0 %v416
    %856 = vmatprep.subr.mxu0 0.0
    %857 = vmatpush1.msra.mxu0 %v417
    %858 = vmatprep.subr.mxu0 0.0
    %859 = vmatpush1.msra.mxu0 %v418
    %860 = vmatprep.subr.mxu0 0.0
    %861 = vmatpush1.msra.mxu0 %v419
    %862 = vmatprep.subr.mxu0 0.0
    %863 = vmatpush1.msra.mxu0 %v420
    %864 = vmatprep.subr.mxu0 0.0
    %865 = vmatpush1.msra.mxu0 %v421
    %866 = vmatprep.subr.mxu0 0.0
    %867 = vmatpush1.msra.mxu0 %v422
    %868 = vmatprep.subr.mxu0 0.0
    %869 = vmatpush1.msra.mxu0 %v423
    %870 = vmatprep.subr.mxu0 0.0
    %871 = vmatpush1.msra.mxu0 %v424
    %872 = vmatprep.subr.mxu0 0.0
    %873 = vmatpush1.msra.mxu0 %v425
    %874 = vmatprep.subr.mxu0 0.0
    %875 = vmatpush1.msra.mxu0 %v426
    %876 = vmatprep.subr.mxu0 0.0
    %877 = vmatpush1.msra.mxu0 %v427
    %878 = vmatprep.subr.mxu0 0.0
    %879 = vmatpush1.msra.mxu0 %v428
    %880 = vmatprep.subr.mxu0 0.0
    %881 = vmatpush1.msra.mxu0 0.0
    %882 = vmatprep.subr.mxu0 0.0
    %883 = vmatpush1.msra.mxu0 0.0
    %884 = vmatprep.subr.mxu0 0.0
    %885 = vmatpush1.msra.mxu0 0.0
    %886 = vmatprep.subr.mxu0 0.0
    %887 = vmatpush1.msra.mxu0 0.0
    %888 = vmatprep.subr.mxu0 0.0
    %889 = vmatpush1.msra.mxu0 0.0
    %890 = vmatprep.subr.mxu0 0.0
    %891 = vmatpush1.msra.mxu0 0.0
    %892 = vmatprep.subr.mxu0 0.0
    %893 = vmatpush1.msra.mxu0 0.0
    %894 = vmatprep.subr.mxu0 0.0
    %895 = vmatpush1.msra.mxu0 0.0
    %896 = vmatprep.subr.mxu0 0.0
    %897 = vmatpush1.msra.mxu0 0.0
    %898 = vmatprep.subr.mxu0 0.0
    %899 = vmatpush1.msra.mxu0 0.0
    %900 = vmatprep.subr.mxu0 0.0
    %901 = vmatpush1.msra.mxu0 0.0
    %902 = vmatprep.subr.mxu0 0.0
    %903 = vmatpush1.msra.mxu0 0.0
    %904 = vmatprep.subr.mxu0 0.0
    %905 = vmatpush1.msra.mxu0 0.0
    %906 = vmatprep.subr.mxu0 0.0
    %907 = vmatpush1.msra.mxu0 0.0
    %908 = vmatprep.subr.mxu0 0.0
    %909 = vmatpush1.msra.mxu0 0.0
    %910 = vmatprep.subr.mxu0 0.0
    %911 = vmatpush1.msra.mxu0 0.0
    %912 = vmatprep.mubr.f32.mxu0 0.0
    %913 = vmatmul.mubr.f32.gmra.mrb[0].mxu0 %v846
    %v914 = vpop.f32.mrb[0].mxu0
    %v915 = vadd.f32 0.0, %v914
    %v916 = vpop.f32.mrb[0].mxu0
    %917 = vdwg.mxu0
    %v918 = vmax.f32 %v915, 0.0
    %v919 = vld [vmem:[%s2] sm:$0xff]
    %vm920 = vcmask 64512
    %v922 = vsel %vm920, %v918, 0
    %924 = vmatprep.subr.mxu0 0.0
    %925 = vmatpush1.msra.mxu0 %v919
    %926 = vmatprep.subr.mxu0 0.0
    %927 = vmatpush1.msra.mxu0 0.0
    %928 = vmatprep.subr.mxu0 0.0
    %929 = vmatpush1.msra.mxu0 0.0
    %930 = vmatprep.subr.mxu0 0.0
    %931 = vmatpush1.msra.mxu0 0.0
    %932 = vmatprep.subr.mxu0 0.0
    %933 = vmatpush1.msra.mxu0 0.0
    %934 = vmatprep.subr.mxu0 0.0
    %935 = vmatpush1.msra.mxu0 0.0
    %936 = vmatprep.subr.mxu0 0.0
    %937 = vmatpush1.msra.mxu0 0.0
    %938 = vmatprep.subr.mxu0 0.0
    %939 = vmatpush1.msra.mxu0 0.0
    %940 = vmatprep.subr.mxu0 0.0
    %941 = vmatpush1.msra.mxu0 0.0
    %942 = vmatprep.subr.mxu0 0.0
    %943 = vmatpush1.msra.mxu0 0.0
    %944 = vmatprep.subr.mxu0 0.0
    %945 = vmatpush1.msra.mxu0 0.0
    %946 = vmatprep.subr.mxu0 0.0
    %947 = vmatpush1.msra.mxu0 0.0
    %948 = vmatprep.subr.mxu0 0.0
    %949 = vmatpush1.msra.mxu0 0.0
    %950 = vmatprep.subr.mxu0 0.0
    %951 = vmatpush1.msra.mxu0 0.0
    %952 = vmatprep.subr.mxu0 0.0
    %953 = vmatpush1.msra.mxu0 0.0
    %954 = vmatprep.subr.mxu0 0.0
    %955 = vmatpush1.msra.mxu0 0.0
    %956 = vmatprep.subr.mxu0 0.0
    %957 = vmatpush1.msra.mxu0 0.0
    %958 = vmatprep.subr.mxu0 0.0
    %959 = vmatpush1.msra.mxu0 0.0
    %960 = vmatprep.subr.mxu0 0.0
    %961 = vmatpush1.msra.mxu0 0.0
    %962 = vmatprep.subr.mxu0 0.0
    %963 = vmatpush1.msra.mxu0 0.0
    %964 = vmatprep.subr.mxu0 0.0
    %965 = vmatpush1.msra.mxu0 0.0
    %966 = vmatprep.subr.mxu0 0.0
    %967 = vmatpush1.msra.mxu0 0.0
    %968 = vmatprep.subr.mxu0 0.0
    %969 = vmatpush1.msra.mxu0 0.0
    %970 = vmatprep.subr.mxu0 0.0
    %971 = vmatpush1.msra.mxu0 0.0
    %972 = vmatprep.subr.mxu0 0.0
    %973 = vmatpush1.msra.mxu0 0.0
    %974 = vmatprep.subr.mxu0 0.0
    %975 = vmatpush1.msra.mxu0 0.0
    %976 = vmatprep.subr.mxu0 0.0
    %977 = vmatpush1.msra.mxu0 0.0
    %978 = vmatprep.subr.mxu0 0.0
    %979 = vmatpush1.msra.mxu0 0.0
    %980 = vmatprep.subr.mxu0 0.0
    %981 = vmatpush1.msra.mxu0 0.0
    %982 = vmatprep.subr.mxu0 0.0
    %983 = vmatpush1.msra.mxu0 0.0
    %984 = vmatprep.subr.mxu0 0.0
    %985 = vmatpush1.msra.mxu0 0.0
    %986 = vmatprep.subr.mxu0 0.0
    %987 = vmatpush1.msra.mxu0 0.0
    %988 = vmatprep.mubr.f32.mxu0 0.0
    %989 = vmatmul.mubr.f32.gmra.mrb[0].mxu0 %v922
    %v990 = vpop.f32.mrb[0].mxu0
    %v991 = vadd.f32 0.0, %v990
    %v992 = vpop.f32.mrb[0].mxu0
    %993 = vdwg.mxu0
    %v994 = vxor.u32 %v991, 2147483648
    %v995 = vmul.f32 %v994, 1.442695
    %v996 = vpow.pop %v995
    %v997 = vadd.f32 %v996, 1.0
    %v998 = vrcp.pop %v997
    %v999 = vmul.f32 1.0, %v998
    %v1000 = vlaneseq
    %v1001 = vshrl.u32 %v1000, 7
    %v1002 = vsub.s32 0, %v1001
    %v1003 = vrot.slane %v999, %v1002
    %1005 = vbcast.lane.b32.xlu0 %v1003, 256
    %v1006 = vpop.permute.xlu0 %1005
    %s1008 = sor.u32 256, 8
    %1009 = vbcast.lane.b32.xlu0 %v1003, %s1008
    %v1010 = vpop.permute.xlu0 %1009
    %s1012 = sor.u32 256, 16
    %1013 = vbcast.lane.b32.xlu0 %v1003, %s1012
    %v1014 = vpop.permute.xlu0 %1013
    %s1016 = sor.u32 256, 24
    %1017 = vbcast.lane.b32.xlu0 %v1003, %s1016
    %v1018 = vpop.permute.xlu0 %1017
    %s1020 = sor.u32 256, 32
    %1021 = vbcast.lane.b32.xlu0 %v1003, %s1020
    %v1022 = vpop.permute.xlu0 %1021
    %s1024 = sor.u32 256, 40
    %1025 = vbcast.lane.b32.xlu0 %v1003, %s1024
    %v1026 = vpop.permute.xlu0 %1025
    %s1028 = sor.u32 256, 48
    %1029 = vbcast.lane.b32.xlu0 %v1003, %s1028
    %v1030 = vpop.permute.xlu0 %1029
    %s1032 = sor.u32 256, 56
    %1033 = vbcast.lane.b32.xlu0 %v1003, %s1032
    %v1034 = vpop.permute.xlu0 %1033
    %s1036 = sor.u32 256, 64
    %1037 = vbcast.lane.b32.xlu0 %v1003, %s1036
    %v1038 = vpop.permute.xlu0 %1037
    %s1040 = sor.u32 256, 72
    %1041 = vbcast.lane.b32.xlu0 %v1003, %s1040
    %v1042 = vpop.permute.xlu0 %1041
    %s1044 = sor.u32 256, 80
    %1045 = vbcast.lane.b32.xlu0 %v1003, %s1044
    %v1046 = vpop.permute.xlu0 %1045
    %s1048 = sor.u32 256, 88
    %1049 = vbcast.lane.b32.xlu0 %v1003, %s1048
    %v1050 = vpop.permute.xlu0 %1049
    %s1052 = sor.u32 256, 96
    %1053 = vbcast.lane.b32.xlu0 %v1003, %s1052
    %v1054 = vpop.permute.xlu0 %1053
    %s1056 = sor.u32 256, 104
    %1057 = vbcast.lane.b32.xlu0 %v1003, %s1056
    %v1058 = vpop.permute.xlu0 %1057
    %s1060 = sor.u32 256, 112
    %1061 = vbcast.lane.b32.xlu0 %v1003, %s1060
    %v1062 = vpop.permute.xlu0 %1061
    %s1064 = sor.u32 256, 120
    %1065 = vbcast.lane.b32.xlu0 %v1003, %s1064
    %v1066 = vpop.permute.xlu0 %1065
    %v1067 = vlaneseq
    %v1068 = vshrl.u32 %v1067, 7
    %v1069 = vsub.s32 1, %v1068
    %v1070 = vrot.slane %v999, %v1069
    %1072 = vbcast.lane.b32.xlu0 %v1070, 256
    %v1073 = vpop.permute.xlu0 %1072
    %s1075 = sor.u32 256, 8
    %1076 = vbcast.lane.b32.xlu0 %v1070, %s1075
    %v1077 = vpop.permute.xlu0 %1076
    %s1079 = sor.u32 256, 16
    %1080 = vbcast.lane.b32.xlu0 %v1070, %s1079
    %v1081 = vpop.permute.xlu0 %1080
    %s1083 = sor.u32 256, 24
    %1084 = vbcast.lane.b32.xlu0 %v1070, %s1083
    %v1085 = vpop.permute.xlu0 %1084
    %s1087 = sor.u32 256, 32
    %1088 = vbcast.lane.b32.xlu0 %v1070, %s1087
    %v1089 = vpop.permute.xlu0 %1088
    %s1091 = sor.u32 256, 40
    %1092 = vbcast.lane.b32.xlu0 %v1070, %s1091
    %v1093 = vpop.permute.xlu0 %1092
    %s1095 = sor.u32 256, 48
    %1096 = vbcast.lane.b32.xlu0 %v1070, %s1095
    %v1097 = vpop.permute.xlu0 %1096
    %s1099 = sor.u32 256, 56
    %1100 = vbcast.lane.b32.xlu0 %v1070, %s1099
    %v1101 = vpop.permute.xlu0 %1100
    %s1103 = sor.u32 256, 64
    %1104 = vbcast.lane.b32.xlu0 %v1070, %s1103
    %v1105 = vpop.permute.xlu0 %1104
    %s1107 = sor.u32 256, 72
    %1108 = vbcast.lane.b32.xlu0 %v1070, %s1107
    %v1109 = vpop.permute.xlu0 %1108
    %s1111 = sor.u32 256, 80
    %1112 = vbcast.lane.b32.xlu0 %v1070, %s1111
    %v1113 = vpop.permute.xlu0 %1112
    %s1115 = sor.u32 256, 88
    %1116 = vbcast.lane.b32.xlu0 %v1070, %s1115
    %v1117 = vpop.permute.xlu0 %1116
    %s1119 = sor.u32 256, 96
    %1120 = vbcast.lane.b32.xlu0 %v1070, %s1119
    %v1121 = vpop.permute.xlu0 %1120
    %s1123 = sor.u32 256, 104
    %1124 = vbcast.lane.b32.xlu0 %v1070, %s1123
    %v1125 = vpop.permute.xlu0 %1124
    %s1127 = sor.u32 256, 112
    %1128 = vbcast.lane.b32.xlu0 %v1070, %s1127
    %v1129 = vpop.permute.xlu0 %1128
    %s1131 = sor.u32 256, 120
    %1132 = vbcast.lane.b32.xlu0 %v1070, %s1131
    %v1133 = vpop.permute.xlu0 %1132
    %v1134 = vlaneseq
    %v1135 = vshrl.u32 %v1134, 7
    %v1136 = vsub.s32 2, %v1135
    %v1137 = vrot.slane %v999, %v1136
    %1139 = vbcast.lane.b32.xlu0 %v1137, 256
    %v1140 = vpop.permute.xlu0 %1139
    %s1142 = sor.u32 256, 8
    %1143 = vbcast.lane.b32.xlu0 %v1137, %s1142
    %v1144 = vpop.permute.xlu0 %1143
    %s1146 = sor.u32 256, 16
    %1147 = vbcast.lane.b32.xlu0 %v1137, %s1146
    %v1148 = vpop.permute.xlu0 %1147
    %s1150 = sor.u32 256, 24
    %1151 = vbcast.lane.b32.xlu0 %v1137, %s1150
    %v1152 = vpop.permute.xlu0 %1151
    %s1154 = sor.u32 256, 32
    %1155 = vbcast.lane.b32.xlu0 %v1137, %s1154
    %v1156 = vpop.permute.xlu0 %1155
    %s1158 = sor.u32 256, 40
    %1159 = vbcast.lane.b32.xlu0 %v1137, %s1158
    %v1160 = vpop.permute.xlu0 %1159
    %s1162 = sor.u32 256, 48
    %1163 = vbcast.lane.b32.xlu0 %v1137, %s1162
    %v1164 = vpop.permute.xlu0 %1163
    %s1166 = sor.u32 256, 56
    %1167 = vbcast.lane.b32.xlu0 %v1137, %s1166
    %v1168 = vpop.permute.xlu0 %1167
    %s1170 = sor.u32 256, 64
    %1171 = vbcast.lane.b32.xlu0 %v1137, %s1170
    %v1172 = vpop.permute.xlu0 %1171
    %s1174 = sor.u32 256, 72
    %1175 = vbcast.lane.b32.xlu0 %v1137, %s1174
    %v1176 = vpop.permute.xlu0 %1175
    %s1178 = sor.u32 256, 80
    %1179 = vbcast.lane.b32.xlu0 %v1137, %s1178
    %v1180 = vpop.permute.xlu0 %1179
    %s1182 = sor.u32 256, 88
    %1183 = vbcast.lane.b32.xlu0 %v1137, %s1182
    %v1184 = vpop.permute.xlu0 %1183
    %s1186 = sor.u32 256, 96
    %1187 = vbcast.lane.b32.xlu0 %v1137, %s1186
    %v1188 = vpop.permute.xlu0 %1187
    %s1190 = sor.u32 256, 104
    %1191 = vbcast.lane.b32.xlu0 %v1137, %s1190
    %v1192 = vpop.permute.xlu0 %1191
    %s1194 = sor.u32 256, 112
    %1195 = vbcast.lane.b32.xlu0 %v1137, %s1194
    %v1196 = vpop.permute.xlu0 %1195
    %s1198 = sor.u32 256, 120
    %1199 = vbcast.lane.b32.xlu0 %v1137, %s1198
    %v1200 = vpop.permute.xlu0 %1199
    %v1201 = vlaneseq
    %v1202 = vshrl.u32 %v1201, 7
    %v1203 = vsub.s32 3, %v1202
    %v1204 = vrot.slane %v999, %v1203
    %1206 = vbcast.lane.b32.xlu0 %v1204, 256
    %v1207 = vpop.permute.xlu0 %1206
    %s1209 = sor.u32 256, 8
    %1210 = vbcast.lane.b32.xlu0 %v1204, %s1209
    %v1211 = vpop.permute.xlu0 %1210
    %s1213 = sor.u32 256, 16
    %1214 = vbcast.lane.b32.xlu0 %v1204, %s1213
    %v1215 = vpop.permute.xlu0 %1214
    %s1217 = sor.u32 256, 24
    %1218 = vbcast.lane.b32.xlu0 %v1204, %s1217
    %v1219 = vpop.permute.xlu0 %1218
    %s1221 = sor.u32 256, 32
    %1222 = vbcast.lane.b32.xlu0 %v1204, %s1221
    %v1223 = vpop.permute.xlu0 %1222
    %s1225 = sor.u32 256, 40
    %1226 = vbcast.lane.b32.xlu0 %v1204, %s1225
    %v1227 = vpop.permute.xlu0 %1226
    %s1229 = sor.u32 256, 48
    %1230 = vbcast.lane.b32.xlu0 %v1204, %s1229
    %v1231 = vpop.permute.xlu0 %1230
    %s1233 = sor.u32 256, 56
    %1234 = vbcast.lane.b32.xlu0 %v1204, %s1233
    %v1235 = vpop.permute.xlu0 %1234
    %s1237 = sor.u32 256, 64
    %1238 = vbcast.lane.b32.xlu0 %v1204, %s1237
    %v1239 = vpop.permute.xlu0 %1238
    %s1241 = sor.u32 256, 72
    %1242 = vbcast.lane.b32.xlu0 %v1204, %s1241
    %v1243 = vpop.permute.xlu0 %1242
    %s1245 = sor.u32 256, 80
    %1246 = vbcast.lane.b32.xlu0 %v1204, %s1245
    %v1247 = vpop.permute.xlu0 %1246
    %s1249 = sor.u32 256, 88
    %1250 = vbcast.lane.b32.xlu0 %v1204, %s1249
    %v1251 = vpop.permute.xlu0 %1250
    %s1253 = sor.u32 256, 96
    %1254 = vbcast.lane.b32.xlu0 %v1204, %s1253
    %v1255 = vpop.permute.xlu0 %1254
    %s1257 = sor.u32 256, 104
    %1258 = vbcast.lane.b32.xlu0 %v1204, %s1257
    %v1259 = vpop.permute.xlu0 %1258
    %s1261 = sor.u32 256, 112
    %1262 = vbcast.lane.b32.xlu0 %v1204, %s1261
    %v1263 = vpop.permute.xlu0 %1262
    %s1265 = sor.u32 256, 120
    %1266 = vbcast.lane.b32.xlu0 %v1204, %s1265
    %v1267 = vpop.permute.xlu0 %1266
    %v1268 = vmul.f32 %v29, %v1006
    %v1269 = vmul.f32 %v30, %v1006
    %v1270 = vmul.f32 %v31, %v1010
    %v1271 = vmul.f32 %v32, %v1010
    %v1272 = vmul.f32 %v33, %v1014
    %v1273 = vmul.f32 %v34, %v1014
    %v1274 = vmul.f32 %v35, %v1018
    %v1275 = vmul.f32 %v36, %v1018
    %v1276 = vmul.f32 %v37, %v1022
    %v1277 = vmul.f32 %v38, %v1022
    %v1278 = vmul.f32 %v39, %v1026
    %v1279 = vmul.f32 %v40, %v1026
    %v1280 = vmul.f32 %v41, %v1030
    %v1281 = vmul.f32 %v42, %v1030
    %v1282 = vmul.f32 %v43, %v1034
    %v1283 = vmul.f32 %v44, %v1034
    %v1284 = vmul.f32 %v45, %v1038
    %v1285 = vmul.f32 %v46, %v1038
    %v1286 = vmul.f32 %v47, %v1042
    %v1287 = vmul.f32 %v48, %v1042
    %v1288 = vmul.f32 %v49, %v1046
    %v1289 = vmul.f32 %v50, %v1046
    %v1290 = vmul.f32 %v51, %v1050
    %v1291 = vmul.f32 %v52, %v1050
    %v1292 = vmul.f32 %v53, %v1054
    %v1293 = vmul.f32 %v54, %v1054
    %v1294 = vmul.f32 %v55, %v1058
    %v1295 = vmul.f32 %v56, %v1058
    %v1296 = vmul.f32 %v57, %v1062
    %v1297 = vmul.f32 %v58, %v1062
    %v1298 = vmul.f32 %v59, %v1066
    %v1299 = vmul.f32 %v60, %v1066
    %v1300 = vmul.f32 %v61, %v1073
    %v1301 = vmul.f32 %v62, %v1073
    %v1302 = vmul.f32 %v63, %v1077
    %v1303 = vmul.f32 %v64, %v1077
    %v1304 = vmul.f32 %v65, %v1081
    %v1305 = vmul.f32 %v66, %v1081
    %v1306 = vmul.f32 %v67, %v1085
    %v1307 = vmul.f32 %v68, %v1085
    %v1308 = vmul.f32 %v69, %v1089
    %v1309 = vmul.f32 %v70, %v1089
    %v1310 = vmul.f32 %v71, %v1093
    %v1311 = vmul.f32 %v72, %v1093
    %v1312 = vmul.f32 %v73, %v1097
    %v1313 = vmul.f32 %v74, %v1097
    %v1314 = vmul.f32 %v75, %v1101
    %v1315 = vmul.f32 %v76, %v1101
    %v1316 = vmul.f32 %v77, %v1105
    %v1317 = vmul.f32 %v78, %v1105
    %v1318 = vmul.f32 %v79, %v1109
    %v1319 = vmul.f32 %v80, %v1109
    %v1320 = vmul.f32 %v81, %v1113
    %v1321 = vmul.f32 %v82, %v1113
    %v1322 = vmul.f32 %v83, %v1117
    %v1323 = vmul.f32 %v84, %v1117
    %v1324 = vmul.f32 %v85, %v1121
    %v1325 = vmul.f32 %v86, %v1121
    %v1326 = vmul.f32 %v87, %v1125
    %v1327 = vmul.f32 %v88, %v1125
    %v1328 = vmul.f32 %v89, %v1129
    %v1329 = vmul.f32 %v90, %v1129
    %v1330 = vmul.f32 %v91, %v1133
    %v1331 = vmul.f32 %v92, %v1133
    %v1332 = vmul.f32 %v93, %v1140
    %v1333 = vmul.f32 %v94, %v1140
    %v1334 = vmul.f32 %v95, %v1144
    %v1335 = vmul.f32 %v96, %v1144
    %v1336 = vmul.f32 %v97, %v1148
    %v1337 = vmul.f32 %v98, %v1148
    %v1338 = vmul.f32 %v99, %v1152
    %v1339 = vmul.f32 %v100, %v1152
    %v1340 = vmul.f32 %v101, %v1156
    %v1341 = vmul.f32 %v102, %v1156
    %v1342 = vmul.f32 %v103, %v1160
    %v1343 = vmul.f32 %v104, %v1160
    %v1344 = vmul.f32 %v105, %v1164
    %v1345 = vmul.f32 %v106, %v1164
    %v1346 = vmul.f32 %v107, %v1168
    %v1347 = vmul.f32 %v108, %v1168
    %v1348 = vmul.f32 %v109, %v1172
    %v1349 = vmul.f32 %v110, %v1172
    %v1350 = vmul.f32 %v111, %v1176
    %v1351 = vmul.f32 %v112, %v1176
    %v1352 = vmul.f32 %v113, %v1180
    %v1353 = vmul.f32 %v114, %v1180
    %v1354 = vmul.f32 %v115, %v1184
    %v1355 = vmul.f32 %v116, %v1184
    %v1356 = vmul.f32 %v117, %v1188
    %v1357 = vmul.f32 %v118, %v1188
    %v1358 = vmul.f32 %v119, %v1192
    %v1359 = vmul.f32 %v120, %v1192
    %v1360 = vmul.f32 %v121, %v1196
    %v1361 = vmul.f32 %v122, %v1196
    %v1362 = vmul.f32 %v123, %v1200
    %v1363 = vmul.f32 %v124, %v1200
    %v1364 = vmul.f32 %v125, %v1207
    %v1365 = vmul.f32 %v126, %v1207
    %v1366 = vmul.f32 %v127, %v1211
    %v1367 = vmul.f32 %v128, %v1211
    %v1368 = vmul.f32 %v129, %v1215
    %v1369 = vmul.f32 %v130, %v1215
    %v1370 = vmul.f32 %v131, %v1219
    %v1371 = vmul.f32 %v132, %v1219
    %v1372 = vmul.f32 %v133, %v1223
    %v1373 = vmul.f32 %v134, %v1223
    %v1374 = vmul.f32 %v135, %v1227
    %v1375 = vmul.f32 %v136, %v1227
    %v1376 = vmul.f32 %v137, %v1231
    %v1377 = vmul.f32 %v138, %v1231
    %v1378 = vmul.f32 %v139, %v1235
    %v1379 = vmul.f32 %v140, %v1235
    %v1380 = vmul.f32 %v141, %v1239
    %v1381 = vmul.f32 %v142, %v1239
    %v1382 = vmul.f32 %v143, %v1243
    %v1383 = vmul.f32 %v144, %v1243
    %v1384 = vmul.f32 %v145, %v1247
    %v1385 = vmul.f32 %v146, %v1247
    %v1386 = vmul.f32 %v147, %v1251
    %v1387 = vmul.f32 %v148, %v1251
    %v1388 = vmul.f32 %v149, %v1255
    %v1389 = vmul.f32 %v150, %v1255
    %v1390 = vmul.f32 %v151, %v1259
    %v1391 = vmul.f32 %v152, %v1259
    %v1392 = vmul.f32 %v153, %v1263
    %v1393 = vmul.f32 %v154, %v1263
    %v1394 = vmul.f32 %v155, %v1267
    %v1395 = vmul.f32 %v156, %v1267
    %1396 = vst [vmem:[#allocation5] sm:$0xff] %v1268
    %1397 = vst [vmem:[#allocation5 + $0x8] sm:$0xff] %v1269
    %1398 = vst [vmem:[#allocation5 + $0x10] sm:$0xff] %v1270
    %1399 = vst [vmem:[#allocation5 + $0x18] sm:$0xff] %v1271
    %1400 = vst [vmem:[#allocation5 + $0x20] sm:$0xff] %v1272
    %1401 = vst [vmem:[#allocation5 + $0x28] sm:$0xff] %v1273
    %1402 = vst [vmem:[#allocation5 + $0x30] sm:$0xff] %v1274
    %1403 = vst [vmem:[#allocation5 + $0x38] sm:$0xff] %v1275
    %1404 = vst [vmem:[#allocation5 + $0x40] sm:$0xff] %v1276
    %1405 = vst [vmem:[#allocation5 + $0x48] sm:$0xff] %v1277
    %1406 = vst [vmem:[#allocation5 + $0x50] sm:$0xff] %v1278
    %1407 = vst [vmem:[#allocation5 + $0x58] sm:$0xff] %v1279
    %1408 = vst [vmem:[#allocation5 + $0x60] sm:$0xff] %v1280
    %1409 = vst [vmem:[#allocation5 + $0x68] sm:$0xff] %v1281
    %1410 = vst [vmem:[#allocation5 + $0x70] sm:$0xff] %v1282
    %1411 = vst [vmem:[#allocation5 + $0x78] sm:$0xff] %v1283
    %1412 = vst [vmem:[#allocation5 + $0x80] sm:$0xff] %v1284
    %1413 = vst [vmem:[#allocation5 + $0x88] sm:$0xff] %v1285
    %1414 = vst [vmem:[#allocation5 + $0x90] sm:$0xff] %v1286
    %1415 = vst [vmem:[#allocation5 + $0x98] sm:$0xff] %v1287
    %1416 = vst [vmem:[#allocation5 + $0xa0] sm:$0xff] %v1288
    %1417 = vst [vmem:[#allocation5 + $0xa8] sm:$0xff] %v1289
    %1418 = vst [vmem:[#allocation5 + $0xb0] sm:$0xff] %v1290
    %1419 = vst [vmem:[#allocation5 + $0xb8] sm:$0xff] %v1291
    %1420 = vst [vmem:[#allocation5 + $0xc0] sm:$0xff] %v1292
    %1421 = vst [vmem:[#allocation5 + $0xc8] sm:$0xff] %v1293
    %1422 = vst [vmem:[#allocation5 + $0xd0] sm:$0xff] %v1294
    %1423 = vst [vmem:[#allocation5 + $0xd8] sm:$0xff] %v1295
    %1424 = vst [vmem:[#allocation5 + $0xe0] sm:$0xff] %v1296
    %1425 = vst [vmem:[#allocation5 + $0xe8] sm:$0xff] %v1297
    %1426 = vst [vmem:[#allocation5 + $0xf0] sm:$0xff] %v1298
    %1427 = vst [vmem:[#allocation5 + $0xf8] sm:$0xff] %v1299
    %1428 = vst [vmem:[#allocation5 + $0x100] sm:$0xff] %v1300
    %1429 = vst [vmem:[#allocation5 + $0x108] sm:$0xff] %v1301
    %1430 = vst [vmem:[#allocation5 + $0x110] sm:$0xff] %v1302
    %1431 = vst [vmem:[#allocation5 + $0x118] sm:$0xff] %v1303
    %1432 = vst [vmem:[#allocation5 + $0x120] sm:$0xff] %v1304
    %1433 = vst [vmem:[#allocation5 + $0x128] sm:$0xff] %v1305
    %1434 = vst [vmem:[#allocation5 + $0x130] sm:$0xff] %v1306
    %1435 = vst [vmem:[#allocation5 + $0x138] sm:$0xff] %v1307
    %1436 = vst [vmem:[#allocation5 + $0x140] sm:$0xff] %v1308
    %1437 = vst [vmem:[#allocation5 + $0x148] sm:$0xff] %v1309
    %1438 = vst [vmem:[#allocation5 + $0x150] sm:$0xff] %v1310
    %1439 = vst [vmem:[#allocation5 + $0x158] sm:$0xff] %v1311
    %1440 = vst [vmem:[#allocation5 + $0x160] sm:$0xff] %v1312
    %1441 = vst [vmem:[#allocation5 + $0x168] sm:$0xff] %v1313
    %1442 = vst [vmem:[#allocation5 + $0x170] sm:$0xff] %v1314
    %1443 = vst [vmem:[#allocation5 + $0x178] sm:$0xff] %v1315
    %1444 = vst [vmem:[#allocation5 + $0x180] sm:$0xff] %v1316
    %1445 = vst [vmem:[#allocation5 + $0x188] sm:$0xff] %v1317
    %1446 = vst [vmem:[#allocation5 + $0x190] sm:$0xff] %v1318
    %1447 = vst [vmem:[#allocation5 + $0x198] sm:$0xff] %v1319
    %1448 = vst [vmem:[#allocation5 + $0x1a0] sm:$0xff] %v1320
    %1449 = vst [vmem:[#allocation5 + $0x1a8] sm:$0xff] %v1321
    %1450 = vst [vmem:[#allocation5 + $0x1b0] sm:$0xff] %v1322
    %1451 = vst [vmem:[#allocation5 + $0x1b8] sm:$0xff] %v1323
    %1452 = vst [vmem:[#allocation5 + $0x1c0] sm:$0xff] %v1324
    %1453 = vst [vmem:[#allocation5 + $0x1c8] sm:$0xff] %v1325
    %1454 = vst [vmem:[#allocation5 + $0x1d0] sm:$0xff] %v1326
    %1455 = vst [vmem:[#allocation5 + $0x1d8] sm:$0xff] %v1327
    %1456 = vst [vmem:[#allocation5 + $0x1e0] sm:$0xff] %v1328
    %1457 = vst [vmem:[#allocation5 + $0x1e8] sm:$0xff] %v1329
    %1458 = vst [vmem:[#allocation5 + $0x1f0] sm:$0xff] %v1330
    %1459 = vst [vmem:[#allocation5 + $0x1f8] sm:$0xff] %v1331
    %1460 = vst [vmem:[#allocation5 + $0x200] sm:$0xff] %v1332
    %1461 = vst [vmem:[#allocation5 + $0x208] sm:$0xff] %v1333
    %1462 = vst [vmem:[#allocation5 + $0x210] sm:$0xff] %v1334
    %1463 = vst [vmem:[#allocation5 + $0x218] sm:$0xff] %v1335
    %1464 = vst [vmem:[#allocation5 + $0x220] sm:$0xff] %v1336
    %1465 = vst [vmem:[#allocation5 + $0x228] sm:$0xff] %v1337
    %1466 = vst [vmem:[#allocation5 + $0x230] sm:$0xff] %v1338
    %1467 = vst [vmem:[#allocation5 + $0x238] sm:$0xff] %v1339
    %1468 = vst [vmem:[#allocation5 + $0x240] sm:$0xff] %v1340
    %1469 = vst [vmem:[#allocation5 + $0x248] sm:$0xff] %v1341
    %1470 = vst [vmem:[#allocation5 + $0x250] sm:$0xff] %v1342
    %1471 = vst [vmem:[#allocation5 + $0x258] sm:$0xff] %v1343
    %1472 = vst [vmem:[#allocation5 + $0x260] sm:$0xff] %v1344
    %1473 = vst [vmem:[#allocation5 + $0x268] sm:$0xff] %v1345
    %1474 = vst [vmem:[#allocation5 + $0x270] sm:$0xff] %v1346
    %1475 = vst [vmem:[#allocation5 + $0x278] sm:$0xff] %v1347
    %1476 = vst [vmem:[#allocation5 + $0x280] sm:$0xff] %v1348
    %1477 = vst [vmem:[#allocation5 + $0x288] sm:$0xff] %v1349
    %1478 = vst [vmem:[#allocation5 + $0x290] sm:$0xff] %v1350
    %1479 = vst [vmem:[#allocation5 + $0x298] sm:$0xff] %v1351
    %1480 = vst [vmem:[#allocation5 + $0x2a0] sm:$0xff] %v1352
    %1481 = vst [vmem:[#allocation5 + $0x2a8] sm:$0xff] %v1353
    %1482 = vst [vmem:[#allocation5 + $0x2b0] sm:$0xff] %v1354
    %1483 = vst [vmem:[#allocation5 + $0x2b8] sm:$0xff] %v1355
    %1484 = vst [vmem:[#allocation5 + $0x2c0] sm:$0xff] %v1356
    %1485 = vst [vmem:[#allocation5 + $0x2c8] sm:$0xff] %v1357
    %1486 = vst [vmem:[#allocation5 + $0x2d0] sm:$0xff] %v1358
    %1487 = vst [vmem:[#allocation5 + $0x2d8] sm:$0xff] %v1359
    %1488 = vst [vmem:[#allocation5 + $0x2e0] sm:$0xff] %v1360
    %1489 = vst [vmem:[#allocation5 + $0x2e8] sm:$0xff] %v1361
    %1490 = vst [vmem:[#allocation5 + $0x2f0] sm:$0xff] %v1362
    %1491 = vst [vmem:[#allocation5 + $0x2f8] sm:$0xff] %v1363
    %1492 = vst [vmem:[#allocation5 + $0x300] sm:$0xff] %v1364
    %1493 = vst [vmem:[#allocation5 + $0x308] sm:$0xff] %v1365
    %1494 = vst [vmem:[#allocation5 + $0x310] sm:$0xff] %v1366
    %1495 = vst [vmem:[#allocation5 + $0x318] sm:$0xff] %v1367
    %1496 = vst [vmem:[#allocation5 + $0x320] sm:$0xff] %v1368
    %1497 = vst [vmem:[#allocation5 + $0x328] sm:$0xff] %v1369
    %1498 = vst [vmem:[#allocation5 + $0x330] sm:$0xff] %v1370
    %1499 = vst [vmem:[#allocation5 + $0x338] sm:$0xff] %v1371
    %1500 = vst [vmem:[#allocation5 + $0x340] sm:$0xff] %v1372
    %1501 = vst [vmem:[#allocation5 + $0x348] sm:$0xff] %v1373
    %1502 = vst [vmem:[#allocation5 + $0x350] sm:$0xff] %v1374
    %1503 = vst [vmem:[#allocation5 + $0x358] sm:$0xff] %v1375
    %1504 = vst [vmem:[#allocation5 + $0x360] sm:$0xff] %v1376
    %1505 = vst [vmem:[#allocation5 + $0x368] sm:$0xff] %v1377
    %1506 = vst [vmem:[#allocation5 + $0x370] sm:$0xff] %v1378
    %1507 = vst [vmem:[#allocation5 + $0x378] sm:$0xff] %v1379
    %1508 = vst [vmem:[#allocation5 + $0x380] sm:$0xff] %v1380
    %1509 = vst [vmem:[#allocation5 + $0x388] sm:$0xff] %v1381
    %1510 = vst [vmem:[#allocation5 + $0x390] sm:$0xff] %v1382
    %1511 = vst [vmem:[#allocation5 + $0x398] sm:$0xff] %v1383
    %1512 = vst [vmem:[#allocation5 + $0x3a0] sm:$0xff] %v1384
    %1513 = vst [vmem:[#allocation5 + $0x3a8] sm:$0xff] %v1385
    %1514 = vst [vmem:[#allocation5 + $0x3b0] sm:$0xff] %v1386
    %1515 = vst [vmem:[#allocation5 + $0x3b8] sm:$0xff] %v1387
    %1516 = vst [vmem:[#allocation5 + $0x3c0] sm:$0xff] %v1388
    %1517 = vst [vmem:[#allocation5 + $0x3c8] sm:$0xff] %v1389
    %1518 = vst [vmem:[#allocation5 + $0x3d0] sm:$0xff] %v1390
    %1519 = vst [vmem:[#allocation5 + $0x3d8] sm:$0xff] %v1391
    %1520 = vst [vmem:[#allocation5 + $0x3e0] sm:$0xff] %v1392
    %1521 = vst [vmem:[#allocation5 + $0x3e8] sm:$0xff] %v1393
    %1522 = vst [vmem:[#allocation5 + $0x3f0] sm:$0xff] %v1394
    %1523 = vst [vmem:[#allocation5 + $0x3f8] sm:$0xff] %v1395
    // Predicated region
    $region18: #{tpu_custom_call.1} parent=1 // pred_check
      _
    $region19: #{tpu_custom_call.1} parent=1 // pred_check_branch
      %1525 = sbr.rel (0) target = $region21
    $region20: #{tpu_custom_call.1} parent=1 // pred_region
      %s1527 = ssub.s32 16384, 16384
      %1528 = vsyncadd [#allocation4], %s1527
      %s1529 = sshll.u32 [#allocation5], 4
      %s1530 = int_to_ptr.vmem [resolvable:$true] %s1529
      %1535 = dma.vmem_to_hbm [thread:$0]  %s1530, 16384, %s3, [#allocation4], 256, 256, 16
    $region21: #{tpu_custom_call.1} parent=1 // pred_fallthru
      _
    // Predicated region
    $region22: #{tpu_custom_call.1} parent=1 // pred_check
      _
    $region23: #{tpu_custom_call.1} parent=1 // pred_check_branch
      %1537 = sbr.rel (0) target = $region25
    $region24: #{tpu_custom_call.1} parent=1 // pred_region
      %1538 = dma.done [#allocation4], 16384
    $region25: #{tpu_custom_call.1} parent=1 // pred_fallthru
      _
    %1539 = vsyncpa [#allocation3], 1
    %1540 = vsyncpa [#allocation4], 1

</llo_original>
